<compile_context>
chip_gen: v5e
topology: v5e:2x2
jax: 0.10.0
libtpu: 0.0.40
codegen_flags: <defaults>
</compile_context>

<pallas_src>
import math

import jax
import jax.numpy as jnp
from jax.experimental import pallas as pl
from jax.experimental.pallas import tpu as pltpu


def _pixelshuffle_perm(C, r):
    """Column permutation: new column i*(r*C) + j*C + c holds the original
    conv output channel c*r*r + i*r + j (PyTorch PixelShuffle ordering)."""
    return [c * r * r + i * r + j
            for i in range(r) for j in range(r) for c in range(C)]


def _conv3x3_relu_ps_kernel(xm_ref, xh0_ref, xh1_ref, w_ref, b_ref, o_ref):
    """Fused 3x3 conv (pad=1) + bias + ReLU + PixelShuffle(r) for one row tile.

    xm_ref : (1, TILE_H, W+2, Cin)   bf16  padded rows [h*T, h*T+T)
    xh0_ref: (1, 1, W+2, Cin)        bf16  padded row   h*T+T     (halo)
    xh1_ref: (1, 1, W+2, Cin)        bf16  padded row   h*T+T+1   (halo)
    w_ref  : (9*Cin, Cout)           bf16  rows (ky,kx,cin); cols perm'd (i,j,c)
    b_ref  : (1, Cout)               f32   bias, cols perm'd (i,j,c)
    o_ref  : (1, TILE_H, r, W, r*C)  bf16  o[0,y,i,x,j*C+c] = shuffled output
    """
    T = o_ref.shape[1]
    r = o_ref.shape[2]
    W = o_ref.shape[3]
    rC = o_ref.shape[4]
    KCin = w_ref.shape[0]

    # (TILE_H + 2, W + 2, Cin) haloed input slab (concat along a major dim).
    slab = jnp.concatenate([xm_ref[0], xh0_ref[0], xh1_ref[0]], axis=0)

    # im2col: fold all 9 taps into the contraction dim -> single MXU matmul
    # with K = 9*Cin.
    taps = [slab[ky:ky + T, kx:kx + W, :]
            for ky in range(3) for kx in range(3)]
    patches = jnp.concatenate(taps, axis=-1).reshape(T * W, KCin)

    acc = jnp.dot(patches, w_ref[...], preferred_element_type=jnp.float32)
    acc = jnp.maximum(acc + b_ref[...], 0.0)          # bias + ReLU in f32
    y = acc.astype(o_ref.dtype)                       # (T*W, r*r*C)

    # Fused PixelShuffle: columns are ordered (i, j, c), so shuffled sub-row i
    # is the contiguous, lane-dense column block [i*r*C, (i+1)*r*C).
    for i in range(r):
        o_ref[0, :, i, :, :] = y[:, i * rC:(i + 1) * rC].reshape(T, W, rC)


def _vmem_bytes_estimate(tile_h, W, Cin, Cout):
    """Rough per-step VMEM footprint (double-buffered blocks + live values)."""
    bf, f32 = 2, 4
    wp = W + 2
    in_blocks = 2 * (tile_h + 2) * wp * Cin * bf
    w_blocks = 2 * (9 * Cin * Cout * bf + Cout * f32)
    out_block = 2 * tile_h * W * Cout * bf
    slab = (tile_h + 2) * wp * Cin * bf
    patches = tile_h * W * 9 * Cin * bf
    acc = tile_h * W * Cout * (f32 + bf)
    return in_blocks + w_blocks + out_block + slab + patches + acc


def _pick_tile_h(H, W, Cin, Cout, budget_bytes=24 * 1024 * 1024):
    """Largest row tile that divides H, keeps >=2 row tiles when possible
    (megacore), and fits a VMEM budget sized for v7x (64 MiB) and v5e/v6e."""
    cap = min(64, H if H < 16 else H // 2)
    for t in range(cap, 0, -1):
        if H % t == 0 and _vmem_bytes_estimate(t, W, Cin, Cout) <= budget_bytes:
            return t
    return 1


def conv3x3_relu_pixelshuffle(x_nhwc, w2d, b2d, r):
    """Fused Conv2d(Cin, r*r*C, 3, 1, 1) + ReLU + PixelShuffle(r).

    x_nhwc: (N, H, W, Cin) bf16.
    w2d   : (9*Cin, r*r*C) bf16, rows ordered (ky, kx, cin), cols perm'd (i,j,c).
    b2d   : (1, r*r*C) f32, same column permutation.
    Returns NHWC (N, H*r, W*r, C) bf16.
    """
    N, H, W, Cin = x_nhwc.shape
    Cout = w2d.shape[1]
    C = Cout // (r * r)
    tile_h = _pick_tile_h(H, W, Cin, Cout)
    n_h = H // tile_h
    wp = W + 2

    # TODO(synk): the zero-pad is one extra HBM round trip of the (small,
    # Cin-channel) input; it could be removed with in-kernel edge masking.
    xp = jnp.pad(x_nhwc, ((0, 0), (1, 1), (1, 1), (0, 0)))

    out5 = pl.pallas_call(
        _conv3x3_relu_ps_kernel,
        out_shape=jax.ShapeDtypeStruct((N, H, r, W, r * C), jnp.bfloat16),
        grid_spec=pltpu.PrefetchScalarGridSpec(
            num_scalar_prefetch=0,
            grid=(N, n_h),
            in_specs=[
                # main rows [h*T, h*T+T) of the padded input
                pl.BlockSpec((1, tile_h, wp, Cin),
                             lambda n, h: (n, h, 0, 0)),
                # two single-row halo blocks: padded rows h*T+T and h*T+T+1
                pl.BlockSpec((1, 1, wp, Cin),
                             lambda n, h: (n, (h + 1) * tile_h, 0, 0)),
                pl.BlockSpec((1, 1, wp, Cin),
                             lambda n, h: (n, (h + 1) * tile_h + 1, 0, 0)),
                pl.BlockSpec((9 * Cin, Cout), lambda n, h: (0, 0)),
                pl.BlockSpec((1, Cout), lambda n, h: (0, 0)),
            ],
            out_specs=pl.BlockSpec((1, tile_h, r, W, r * C),
                                   lambda n, h: (n, h, 0, 0, 0)),
        ),
        compiler_params=pltpu.CompilerParams(
            dimension_semantics=("parallel", "parallel"),
            vmem_limit_bytes=48 * 1024 * 1024),
    )(xp, xp, xp, w2d, b2d)

    # (N, H, r, W, r*C) -> (N, H*r, W*r, C): adjacent-dim merges only => free.
    return out5.reshape(N, H * r, W * r, C)


class UpsampleBlockPallas:
    """Pallas equivalent of _UpsampleBlock(n_channels, scale, group=1)."""

    def __init__(self, n_channels, scale, key):
        assert scale in (2, 3, 4, 8), "unsupported scale"
        # TODO(synk): grouped conv (group > 1) not implemented; group=1 only.
        self.scale = scale
        self.n_channels = n_channels
        if scale in (2, 4, 8):
            n_stages, r = int(math.log(scale, 2)), 2
        else:
            n_stages, r = 1, 3
        self.stages_ref = []      # (w_hwio f32, bias f32, r)  -- for validation
        self.stages_kernel = []   # (w2d bf16, b2d f32, r)     -- for the kernel
        cin = n_channels
        for _ in range(n_stages):
            key, kw, kb = jax.random.split(key, 3)
            cout = n_channels * r * r
            fan_in = cin * 9
            bound = 1.0 / math.sqrt(fan_in)
            # PyTorch Conv2d layout (Cout, Cin, 3, 3) -> HWIO (3, 3, Cin, Cout)
            w_oihw = jax.random.uniform(kw, (cout, cin, 3, 3), jnp.float32,
                                        minval=-bound, maxval=bound)
            b = jax.random.uniform(kb, (cout,), jnp.float32,
                                   minval=-bound, maxval=bound)
            w_hwio = jnp.transpose(w_oihw, (2, 3, 1, 0))
            perm = jnp.array(_pixelshuffle_perm(n_channels, r), jnp.int32)
            w2d = w_hwio.reshape(9 * cin, cout)[:, perm].astype(jnp.bfloat16)
            b2d = b[perm].reshape(1, cout).astype(jnp.float32)
            self.stages_ref.append((w_hwio, b, r))
            self.stages_kernel.append((w2d, b2d, r))

    def __call__(self, x_nchw):
        # NCHW f32 -> NHWC bf16 (bf16 stage tensors halve HBM traffic).
        x = jnp.transpose(x_nchw, (0, 2, 3, 1)).astype(jnp.bfloat16)
        for (w2d, b2d, r) in self.stages_kernel:
            x = conv3x3_relu_pixelshuffle(x, w2d, b2d, r)
        return jnp.transpose(x, (0, 3, 1, 2)).astype(jnp.float32)


def _reference_forward(x_nchw, stages):
    """Pure-JAX f32 reference (lax conv + pixel shuffle) for validation."""
    x = x_nchw
    for (w_hwio, b, r) in stages:
        y = jax.lax.conv_general_dilated(
            x, w_hwio, window_strides=(1, 1), padding=((1, 1), (1, 1)),
            dimension_numbers=("NCHW", "HWIO", "NCHW"))
        y = jax.nn.relu(y + b[None, :, None, None])
        N, Crr, H, W = y.shape
        C = Crr // (r * r)
        y = y.reshape(N, C, r, r, H, W)
        y = jnp.transpose(y, (0, 1, 4, 2, 5, 3)).reshape(N, C, H * r, W * r)
        x = y
    return x


if __name__ == "__main__":
    key = jax.random.PRNGKey(0)
    k_in, k_params = jax.random.split(key)

    N, C, H, W = 2, 4, 16, 16
    scale = 2
    x = jax.random.normal(k_in, (N, C, H, W), jnp.float32)

    block = UpsampleBlockPallas(n_channels=C, scale=scale, key=k_params)
    out = jax.block_until_ready(block(x))

    assert out.shape == (N, C, H * scale, W * scale), out.shape

    ref = jax.block_until_ready(_reference_forward(x, block.stages_ref))
    # bf16 operands + bf16 stage tensors (f32 accumulation) vs f32 reference.
    assert jnp.allclose(out, ref, atol=5e-2, rtol=5e-2), "mismatch vs reference"

    print("KERNEL_OK")
</pallas_src>

<mosaic_0001>
module attributes {stable_mosaic.version = 11 : i64} {
  func.func @_conv3x3_relu_ps_kernel(%arg0: i32, %arg1: i32, %arg2: memref<1x8x18x4xbf16, #tpu.memory_space<vmem>>, %arg3: memref<1x1x18x4xbf16, #tpu.memory_space<vmem>>, %arg4: memref<1x1x18x4xbf16, #tpu.memory_space<vmem>>, %arg5: memref<36x16xbf16, #tpu.memory_space<vmem>>, %arg6: memref<1x16xf32, #tpu.memory_space<vmem>>, %arg7: memref<1x8x2x16x8xbf16, #tpu.memory_space<vmem>>) attributes {dimension_semantics = [#tpu.dimension_semantics<parallel>, #tpu.dimension_semantics<parallel>], iteration_bounds = array<i64: 2, 2>, scalar_prefetch = 0 : i64, scratch_operands = 0 : i64, tpu.core_type = #tpu.core_type<tc>, window_params = [{transform_indices = @transform_0, window_bounds = array<i64: 1, 8, 18, 4>}, {transform_indices = @transform_1, window_bounds = array<i64: 1, 1, 18, 4>}, {transform_indices = @transform_2, window_bounds = array<i64: 1, 1, 18, 4>}, {pipeline_mode = #tpu.pipeline_mode<synchronous>, transform_indices = @transform_3, window_bounds = array<i64: 36, 16>}, {pipeline_mode = #tpu.pipeline_mode<synchronous>, transform_indices = @transform_4, window_bounds = array<i64: 1, 16>}, {transform_indices = @transform_5, window_bounds = array<i64: 1, 8, 2, 16, 8>}]} {
    %c0 = arith.constant 0 : index
    %c0_0 = arith.constant 0 : index
    %c0_1 = arith.constant 0 : index
    %c0_2 = arith.constant 0 : index
    %0 = vector.load %arg2[%c0, %c0_0, %c0_1, %c0_2] : memref<1x8x18x4xbf16, #tpu.memory_space<vmem>>, vector<1x8x18x4xbf16>
    %1 = vector.shape_cast %0 : vector<1x8x18x4xbf16> to vector<8x18x4xbf16>
    %c0_3 = arith.constant 0 : index
    %c0_4 = arith.constant 0 : index
    %c0_5 = arith.constant 0 : index
    %c0_6 = arith.constant 0 : index
    %2 = vector.load %arg3[%c0_3, %c0_4, %c0_5, %c0_6] : memref<1x1x18x4xbf16, #tpu.memory_space<vmem>>, vector<1x1x18x4xbf16>
    %3 = vector.shape_cast %2 : vector<1x1x18x4xbf16> to vector<1x18x4xbf16>
    %c0_7 = arith.constant 0 : index
    %c0_8 = arith.constant 0 : index
    %c0_9 = arith.constant 0 : index
    %c0_10 = arith.constant 0 : index
    %4 = vector.load %arg4[%c0_7, %c0_8, %c0_9, %c0_10] : memref<1x1x18x4xbf16, #tpu.memory_space<vmem>>, vector<1x1x18x4xbf16>
    %5 = vector.shape_cast %4 : vector<1x1x18x4xbf16> to vector<1x18x4xbf16>
    %6 = tpu.concatenate %1, %3, %5 in 0 : vector<8x18x4xbf16>, vector<1x18x4xbf16>, vector<1x18x4xbf16> -> vector<10x18x4xbf16>
    %7 = vector.extract_strided_slice %6 {offsets = [0, 0, 0], sizes = [8, 16, 4], strides = [1, 1, 1]} : vector<10x18x4xbf16> to vector<8x16x4xbf16>
    %8 = vector.extract_strided_slice %6 {offsets = [0, 1, 0], sizes = [8, 16, 4], strides = [1, 1, 1]} : vector<10x18x4xbf16> to vector<8x16x4xbf16>
    %9 = vector.extract_strided_slice %6 {offsets = [0, 2, 0], sizes = [8, 16, 4], strides = [1, 1, 1]} : vector<10x18x4xbf16> to vector<8x16x4xbf16>
    %10 = vector.extract_strided_slice %6 {offsets = [1, 0, 0], sizes = [8, 16, 4], strides = [1, 1, 1]} : vector<10x18x4xbf16> to vector<8x16x4xbf16>
    %11 = vector.extract_strided_slice %6 {offsets = [1, 1, 0], sizes = [8, 16, 4], strides = [1, 1, 1]} : vector<10x18x4xbf16> to vector<8x16x4xbf16>
    %12 = vector.extract_strided_slice %6 {offsets = [1, 2, 0], sizes = [8, 16, 4], strides = [1, 1, 1]} : vector<10x18x4xbf16> to vector<8x16x4xbf16>
    %13 = vector.extract_strided_slice %6 {offsets = [2, 0, 0], sizes = [8, 16, 4], strides = [1, 1, 1]} : vector<10x18x4xbf16> to vector<8x16x4xbf16>
    %14 = vector.extract_strided_slice %6 {offsets = [2, 1, 0], sizes = [8, 16, 4], strides = [1, 1, 1]} : vector<10x18x4xbf16> to vector<8x16x4xbf16>
    %15 = vector.extract_strided_slice %6 {offsets = [2, 2, 0], sizes = [8, 16, 4], strides = [1, 1, 1]} : vector<10x18x4xbf16> to vector<8x16x4xbf16>
    %16 = tpu.concatenate %7, %8, %9, %10, %11, %12, %13, %14, %15 in 2 : vector<8x16x4xbf16>, vector<8x16x4xbf16>, vector<8x16x4xbf16>, vector<8x16x4xbf16>, vector<8x16x4xbf16>, vector<8x16x4xbf16>, vector<8x16x4xbf16>, vector<8x16x4xbf16>, vector<8x16x4xbf16> -> vector<8x16x36xbf16>
    %17 = vector.shape_cast %16 : vector<8x16x36xbf16> to vector<128x36xbf16>
    %c0_11 = arith.constant 0 : index
    %c0_12 = arith.constant 0 : index
    %18 = vector.load %arg5[%c0_11, %c0_12] : memref<36x16xbf16, #tpu.memory_space<vmem>>, vector<36x16xbf16>
    %cst = arith.constant dense<0.000000e+00> : vector<128x16xf32>
    %19 = tpu.matmul %17, %18, %cst {dimension_numbers = #tpu.dot_dimension_numbers<[1], [0], [0], [1], [0, 0, 1, 1], [], []>} : vector<128x36xbf16>, vector<36x16xbf16>, vector<128x16xf32> -> vector<128x16xf32>
    %c0_13 = arith.constant 0 : index
    %c0_14 = arith.constant 0 : index
    %20 = vector.load %arg6[%c0_13, %c0_14] : memref<1x16xf32, #tpu.memory_space<vmem>>, vector<1x16xf32>
    %21 = vector.broadcast %20 : vector<1x16xf32> to vector<128x16xf32>
    %22 = arith.addf %19, %21 : vector<128x16xf32>
    %cst_15 = arith.constant 0.000000e+00 : f32
    %23 = vector.broadcast %cst_15 : f32 to vector<128x16xf32>
    %24 = arith.maximumf %22, %23 : vector<128x16xf32>
    %25 = arith.truncf %24 : vector<128x16xf32> to vector<128x16xbf16>
    %26 = vector.extract_strided_slice %25 {offsets = [0, 0], sizes = [128, 8], strides = [1, 1]} : vector<128x16xbf16> to vector<128x8xbf16>
    %27 = vector.shape_cast %26 : vector<128x8xbf16> to vector<8x16x8xbf16>
    %c0_16 = arith.constant 0 : index
    %c0_17 = arith.constant 0 : index
    %c0_18 = arith.constant 0 : index
    %c0_19 = arith.constant 0 : index
    %c0_20 = arith.constant 0 : index
    %28 = vector.load %arg7[%c0_16, %c0_17, %c0_18, %c0_19, %c0_20] : memref<1x8x2x16x8xbf16, #tpu.memory_space<vmem>>, vector<1x8x1x16x8xbf16>
    %29 = vector.shape_cast %28 : vector<1x8x1x16x8xbf16> to vector<8x16x8xbf16>
    %30 = vector.shape_cast %27 : vector<8x16x8xbf16> to vector<1x8x1x16x8xbf16>
    tpu.vector_store %arg7[%c0_16, %c0_17, %c0_18, %c0_19, %c0_20], %30 {strides = array<i32>} : memref<1x8x2x16x8xbf16, #tpu.memory_space<vmem>>, vector<1x8x1x16x8xbf16>,
    %31 = vector.extract_strided_slice %25 {offsets = [0, 8], sizes = [128, 8], strides = [1, 1]} : vector<128x16xbf16> to vector<128x8xbf16>
    %32 = vector.shape_cast %31 : vector<128x8xbf16> to vector<8x16x8xbf16>
    %c0_21 = arith.constant 0 : index
    %c0_22 = arith.constant 0 : index
    %c1 = arith.constant 1 : index
    %c0_23 = arith.constant 0 : index
    %c0_24 = arith.constant 0 : index
    %33 = vector.load %arg7[%c0_21, %c0_22, %c1, %c0_23, %c0_24] : memref<1x8x2x16x8xbf16, #tpu.memory_space<vmem>>, vector<1x8x1x16x8xbf16>
    %34 = vector.shape_cast %33 : vector<1x8x1x16x8xbf16> to vector<8x16x8xbf16>
    %35 = vector.shape_cast %32 : vector<8x16x8xbf16> to vector<1x8x1x16x8xbf16>
    tpu.vector_store %arg7[%c0_21, %c0_22, %c1, %c0_23, %c0_24], %35 {strides = array<i32>} : memref<1x8x2x16x8xbf16, #tpu.memory_space<vmem>>, vector<1x8x1x16x8xbf16>,
    return
  }
  func.func @transform_0(%arg0: i32, %arg1: i32) -> (i32, i32, i32, i32) {
    %c0_i32 = arith.constant 0 : i32
    %c0_i32_0 = arith.constant 0 : i32
    %c0_i32_1 = arith.constant 0 : i32
    return %arg0, %arg1, %c0_i32, %c0_i32_0 : i32, i32, i32, i32
  }
  func.func @transform_1(%arg0: i32, %arg1: i32) -> (i32, i32, i32, i32) {
    %c1_i32 = arith.constant 1 : i32
    %0 = arith.addi %arg1, %c1_i32 : i32
    %c8_i32 = arith.constant 8 : i32
    %1 = arith.muli %0, %c8_i32 : i32
    %c0_i32 = arith.constant 0 : i32
    %c0_i32_0 = arith.constant 0 : i32
    %c0_i32_1 = arith.constant 0 : i32
    return %arg0, %1, %c0_i32, %c0_i32_0 : i32, i32, i32, i32
  }
  func.func @transform_2(%arg0: i32, %arg1: i32) -> (i32, i32, i32, i32) {
    %c1_i32 = arith.constant 1 : i32
    %0 = arith.addi %arg1, %c1_i32 : i32
    %c8_i32 = arith.constant 8 : i32
    %1 = arith.muli %0, %c8_i32 : i32
    %c1_i32_0 = arith.constant 1 : i32
    %2 = arith.addi %1, %c1_i32_0 : i32
    %c0_i32 = arith.constant 0 : i32
    %c0_i32_1 = arith.constant 0 : i32
    %c0_i32_2 = arith.constant 0 : i32
    return %arg0, %2, %c0_i32, %c0_i32_1 : i32, i32, i32, i32
  }
  func.func @transform_3(%arg0: i32, %arg1: i32) -> (i32, i32) {
    %c0_i32 = arith.constant 0 : i32
    %c0_i32_0 = arith.constant 0 : i32
    %c0_i32_1 = arith.constant 0 : i32
    return %c0_i32, %c0_i32_0 : i32, i32
  }
  func.func @transform_4(%arg0: i32, %arg1: i32) -> (i32, i32) {
    %c0_i32 = arith.constant 0 : i32
    %c0_i32_0 = arith.constant 0 : i32
    %c0_i32_1 = arith.constant 0 : i32
    return %c0_i32, %c0_i32_0 : i32, i32
  }
  func.func @transform_5(%arg0: i32, %arg1: i32) -> (i32, i32, i32, i32, i32) {
    %c0_i32 = arith.constant 0 : i32
    %c0_i32_0 = arith.constant 0 : i32
    %c0_i32_1 = arith.constant 0 : i32
    %c0_i32_2 = arith.constant 0 : i32
    return %arg0, %arg1, %c0_i32, %c0_i32_0, %c0_i32_1 : i32, i32, i32, i32, i32
  }
}

</mosaic_0001>

<llo_original>
// kernel: tpu_custom_call.1
$region0: #{tpu_custom_call.1}
  #allocation0 [shape = 'u32[]', space=smem, size = 0x4, offset = 0x4, fixed_abs, tag = 'smem constant byte address 0x4 - core index']
  #allocation1 [shape = 'u32[72,128]{1,0:T(1,128)}', space=vmem, size = 0x9000, scoped, tag = 'internal scratch']
  %s0 = inlined_call_operand.vmem [shape: bf16[2,18,18,4], index: 0, kind: input, shape index: {}]
  %s1 = inlined_call_operand.vmem [shape: bf16[2,18,18,4], index: 1, kind: input, shape index: {}]
  %s2 = inlined_call_operand.vmem [shape: bf16[2,18,18,4], index: 2, kind: input, shape index: {}]
  %s3 = inlined_call_operand.vmem [shape: bf16[36,16], index: 3, kind: input, shape index: {}]
  %s4 = inlined_call_operand.vmem [shape: f32[1,16], index: 4, kind: input, shape index: {}]
  %s5 = inlined_call_operand.vmem [shape: bf16[2,16,2,16,8], index: 5, kind: output, shape index: {}]
  %s6 = sld [smem:[#allocation0]]
  $region53: #{tpu_custom_call.1} parent=0
    _
  %s8 = ssub.s32 1, %s6
  %s9 = scalar_select 0, %s8, %s6
  loop: start=0, step=1, limit=6
  $region2: #{tpu_custom_call.1} parent=0 // loop_pre_header
    _
  $region3: #{tpu_custom_call.1} parent=0 // loop_header
    %s11 = sphi 0, %s15
    %p12 = scmp.ge.s32.totalorder %s11, 6
    %s18 = sphi 0, %s30
    %s19 = sphi 0, %s26
    %s20 = sphi 0, %s18
    %s21 = sphi 0, %s19
    %s22 = sphi 0, %s20
    %s23 = sphi 0, %s21
    %s35 = sphi 0, %s37
    %s38 = sphi 0, %s35
    %s39 = sphi 0, %s38
    %s55 = sphi 0, %s39
    %s67 = sphi 0, %s69
    %s70 = sphi 0, %s67
    %s71 = sphi 0, %s70
    %s87 = sphi 0, %s71
    %s101 = sphi 0, %s103
    %s104 = sphi 0, %s101
    %s105 = sphi 0, %s104
    %s121 = sphi 0, %s105
    %s125 = sphi 0, %s125
    %s127 = sphi 0, %s125
    %s128 = sphi 0, %s127
    %s142 = sphi 0, %s128
    %s146 = sphi 0, %s146
    %s148 = sphi 0, %s146
    %s149 = sphi 0, %s148
    %s163 = sphi 0, %s149
    %s171 = sphi 0, %s173
    %s174 = sphi 0, %s171
    %s175 = sphi 0, %s174
    %s191 = sphi 0, %s175
  $region4: #{tpu_custom_call.1} parent=0 // loop_header_branch
    %14 = sbr.rel (%p12) target = $region8
  $region5: #{tpu_custom_call.1} parent=0 // loop_body
    %s16 = ssub.s32 %s11, 1
    %s17 = ssub.s32 %s11, 2
    %s24 = sadd.s32 1, %s19
    %p25 = scmp.ge.s32.totalorder %s24, 2
    %s26 = scalar_select %p25, 0, %s24
    %s27 = sadd.s32 1, %s18
    %s28 = scalar_select %p25, %s27, %s18
    %p29 = scmp.ge.s32.totalorder %s28, 2
    %s30 = scalar_select %p29, 0, %s28
    %s31 = ssub.s32 %s18, %s30
    %s32 = ssub.s32 %s19, %s26
    %s33 = sor.u32 %s31, %s32
    %p34 = scmp.eq.s32.totalorder %s33, 0
    %s36 = sadd.s32 %s35, 1
    %s37 = scalar_select %p34, %s35, %s36
    %p40 = pneg %p34
    %p41 = scmp.eq.s32.totalorder %s11, 3
    %p42 = por %p40, %p41
    %p43 = scmp.ne.s32.totalorder %s35, %s38
    %p44 = scmp.eq.s32.totalorder %s11, 0
    %p45 = por %p43, %p44
    %p46 = scmp.ne.s32.totalorder %s35, %s38
    %p47 = scmp.eq.s32.totalorder %s16, 3
    %p48 = por %p46, %p47
    %p49 = scmp.ne.s32.totalorder %s38, %s39
    %p50 = scmp.eq.s32.totalorder %s16, 0
    %p51 = por %p49, %p50
    %p52 = scmp.ne.s32.totalorder %s38, %s39
    %p53 = scmp.eq.s32.totalorder %s17, 3
    %p54 = por %p52, %p53
    %p56 = scmp.ne.s32.totalorder %s39, %s55
    %p57 = scmp.eq.s32.totalorder %s17, 0
    %p58 = por %p56, %p57
    %s59 = sadd.s32 %s19, 1
    %s60 = smul.u32 %s59, 8
    %s61 = sadd.s32 %s26, 1
    %s62 = smul.u32 %s61, 8
    %s63 = ssub.s32 %s18, %s30
    %s64 = ssub.s32 %s60, %s62
    %s65 = sor.u32 %s63, %s64
    %p66 = scmp.eq.s32.totalorder %s65, 0
    %s68 = sadd.s32 %s67, 1
    %s69 = scalar_select %p66, %s67, %s68
    %p72 = pneg %p66
    %p73 = scmp.eq.s32.totalorder %s11, 3
    %p74 = por %p72, %p73
    %p75 = scmp.ne.s32.totalorder %s67, %s70
    %p76 = scmp.eq.s32.totalorder %s11, 0
    %p77 = por %p75, %p76
    %p78 = scmp.ne.s32.totalorder %s67, %s70
    %p79 = scmp.eq.s32.totalorder %s16, 3
    %p80 = por %p78, %p79
    %p81 = scmp.ne.s32.totalorder %s70, %s71
    %p82 = scmp.eq.s32.totalorder %s16, 0
    %p83 = por %p81, %p82
    %p84 = scmp.ne.s32.totalorder %s70, %s71
    %p85 = scmp.eq.s32.totalorder %s17, 3
    %p86 = por %p84, %p85
    %p88 = scmp.ne.s32.totalorder %s71, %s87
    %p89 = scmp.eq.s32.totalorder %s17, 0
    %p90 = por %p88, %p89
    %s91 = sadd.s32 %s19, 1
    %s92 = smul.u32 %s91, 8
    %s93 = sadd.s32 %s92, 1
    %s94 = sadd.s32 %s26, 1
    %s95 = smul.u32 %s94, 8
    %s96 = sadd.s32 %s95, 1
    %s97 = ssub.s32 %s18, %s30
    %s98 = ssub.s32 %s93, %s96
    %s99 = sor.u32 %s97, %s98
    %p100 = scmp.eq.s32.totalorder %s99, 0
    %s102 = sadd.s32 %s101, 1
    %s103 = scalar_select %p100, %s101, %s102
    %p106 = pneg %p100
    %p107 = scmp.eq.s32.totalorder %s11, 3
    %p108 = por %p106, %p107
    %p109 = scmp.ne.s32.totalorder %s101, %s104
    %p110 = scmp.eq.s32.totalorder %s11, 0
    %p111 = por %p109, %p110
    %p112 = scmp.ne.s32.totalorder %s101, %s104
    %p113 = scmp.eq.s32.totalorder %s16, 3
    %p114 = por %p112, %p113
    %p115 = scmp.ne.s32.totalorder %s104, %s105
    %p116 = scmp.eq.s32.totalorder %s16, 0
    %p117 = por %p115, %p116
    %p118 = scmp.ne.s32.totalorder %s104, %s105
    %p119 = scmp.eq.s32.totalorder %s17, 3
    %p120 = por %p118, %p119
    %p122 = scmp.ne.s32.totalorder %s105, %s121
    %p123 = scmp.eq.s32.totalorder %s17, 0
    %p124 = por %p122, %p123
    %s126 = sadd.s32 %s125, 1
    %p129 = scmp.eq.s32.totalorder %s11, 3
    %p130 = scmp.ne.s32.totalorder %s125, %s127
    %p131 = scmp.eq.s32.totalorder %s11, 0
    %p132 = por %p130, %p131
    %p133 = scmp.ne.s32.totalorder %s125, %s127
    %p134 = scmp.eq.s32.totalorder %s16, 3
    %p135 = por %p133, %p134
    %p136 = scmp.ne.s32.totalorder %s127, %s128
    %p137 = scmp.eq.s32.totalorder %s16, 0
    %p138 = por %p136, %p137
    %p139 = scmp.ne.s32.totalorder %s127, %s128
    %p140 = scmp.eq.s32.totalorder %s17, 3
    %p141 = por %p139, %p140
    %p143 = scmp.ne.s32.totalorder %s128, %s142
    %p144 = scmp.eq.s32.totalorder %s17, 0
    %p145 = por %p143, %p144
    %s147 = sadd.s32 %s146, 1
    %p150 = scmp.eq.s32.totalorder %s11, 3
    %p151 = scmp.ne.s32.totalorder %s146, %s148
    %p152 = scmp.eq.s32.totalorder %s11, 0
    %p153 = por %p151, %p152
    %p154 = scmp.ne.s32.totalorder %s146, %s148
    %p155 = scmp.eq.s32.totalorder %s16, 3
    %p156 = por %p154, %p155
    %p157 = scmp.ne.s32.totalorder %s148, %s149
    %p158 = scmp.eq.s32.totalorder %s16, 0
    %p159 = por %p157, %p158
    %p160 = scmp.ne.s32.totalorder %s148, %s149
    %p161 = scmp.eq.s32.totalorder %s17, 3
    %p162 = por %p160, %p161
    %p164 = scmp.ne.s32.totalorder %s149, %s163
    %p165 = scmp.eq.s32.totalorder %s17, 0
    %p166 = por %p164, %p165
    %s167 = ssub.s32 %s18, %s30
    %s168 = ssub.s32 %s19, %s26
    %s169 = sor.u32 %s167, %s168
    %p170 = scmp.eq.s32.totalorder %s169, 0
    %s172 = sadd.s32 %s171, 1
    %s173 = scalar_select %p170, %s171, %s172
    %p176 = pneg %p170
    %p177 = scmp.eq.s32.totalorder %s11, 3
    %p178 = por %p176, %p177
    %p179 = scmp.ne.s32.totalorder %s171, %s174
    %p180 = scmp.eq.s32.totalorder %s11, 0
    %p181 = por %p179, %p180
    %p182 = scmp.ne.s32.totalorder %s171, %s174
    %p183 = scmp.eq.s32.totalorder %s16, 3
    %p184 = por %p182, %p183
    %p185 = scmp.ne.s32.totalorder %s174, %s175
    %p186 = scmp.eq.s32.totalorder %s16, 0
    %p187 = por %p185, %p186
    %p188 = scmp.ne.s32.totalorder %s174, %s175
    %p189 = scmp.eq.s32.totalorder %s17, 3
    %p190 = por %p188, %p189
    %p192 = scmp.ne.s32.totalorder %s175, %s191
    %p193 = scmp.eq.s32.totalorder %s17, 0
    %p194 = por %p192, %p193
    %p195 = scmp.le.s32.totalorder 1, %s11
    %p196 = scmp.lt.s32.totalorder %s11, 5
    %p197 = pnand %p195, %p196
    %p198 = pneg %p197
    // Predicated region
    $region9: #{tpu_custom_call.1} parent=5 // pred_check
      _
    $region10: #{tpu_custom_call.1} parent=5 // pred_check_branch
      %200 = sbr.rel (%p197) target = $region12
    $region11: #{tpu_custom_call.1} parent=5 // pred_region
      %s201 = ssub.s32 %s11, 1
      // Predicated region
      $region13: #{tpu_custom_call.1} parent=11 // pred_check
        %p202 = pneg %p138
      $region14: #{tpu_custom_call.1} parent=11 // pred_check_branch
        %204 = sbr.rel (%p202) target = $region16
      $region15: #{tpu_custom_call.1} parent=11 // pred_region
        _
      $region16: #{tpu_custom_call.1} parent=11 // pred_fallthru
        _
      // Predicated region
      $region17: #{tpu_custom_call.1} parent=11 // pred_check
        %p205 = pneg %p159
      $region18: #{tpu_custom_call.1} parent=11 // pred_check_branch
        %207 = sbr.rel (%p205) target = $region20
      $region19: #{tpu_custom_call.1} parent=11 // pred_region
        _
      $region20: #{tpu_custom_call.1} parent=11 // pred_fallthru
        _
    $region12: #{tpu_custom_call.1} parent=5 // pred_fallthru
      _
    %p208 = scmp.lt.s32.totalorder %s11, 4
    // Predicated region
    $region21: #{tpu_custom_call.1} parent=5 // pred_check
      %p209 = pneg %p208
    $region22: #{tpu_custom_call.1} parent=5 // pred_check_branch
      %211 = sbr.rel (%p209) target = $region24
    $region23: #{tpu_custom_call.1} parent=5 // pred_region
      // Predicated region
      $region25: #{tpu_custom_call.1} parent=23 // pred_check
        %p212 = pneg %p45
      $region26: #{tpu_custom_call.1} parent=23 // pred_check_branch
        %214 = sbr.rel (%p212) target = $region28
      $region27: #{tpu_custom_call.1} parent=23 // pred_region
        %s215 = smul.u32 8, %s19
        %s216 = ssub.s32 18, %s215
        %p217 = scmp.lt.s32.totalorder %s216, 8
        %s218 = scalar_select %p217, %s216, 8
        %s219 = smul.u32 4, %s218
        %s220 = smul.u32 %s219, 3
        %p221 = scmp.lt.s32.totalorder %s18, 1
        %s222 = scalar_select %p221, %s18, 1
        %p223 = scmp.lt.s32.totalorder %s215, 17
        %s224 = scalar_select %p223, %s215, 17
        %s225 = smul.addr %s224, 3
        %s226 = smul.addr %s222, 54
        %s227 = sadd.s32 %s225, %s226
        %s228 = smul.addr %s227, 4
        %s229 = scalar_lea.vmem %s0, %s228
        %s230 = smul.u32 8, %s19
        %s231 = ssub.s32 18, %s230
        %p232 = scmp.lt.s32.totalorder %s231, 8
        %s233 = scalar_select %p232, %s231, 8
        %s234 = smul.u32 4, %s233
        %s235 = smul.u32 %s234, 3
      $region28: #{tpu_custom_call.1} parent=23 // pred_fallthru
        _
      // Predicated region
      $region29: #{tpu_custom_call.1} parent=23 // pred_check
        %p236 = pneg %p77
      $region30: #{tpu_custom_call.1} parent=23 // pred_check_branch
        %238 = sbr.rel (%p236) target = $region32
      $region31: #{tpu_custom_call.1} parent=23 // pred_region
        %s239 = sadd.s32 %s19, 1
        %s240 = smul.u32 %s239, 8
        %p241 = scmp.lt.s32.totalorder %s18, 1
        %s242 = scalar_select %p241, %s18, 1
        %p243 = scmp.lt.s32.totalorder %s240, 17
        %s244 = scalar_select %p243, %s240, 17
        %s245 = smul.addr %s244, 3
        %s246 = smul.addr %s242, 54
        %s247 = sadd.s32 %s245, %s246
        %s248 = smul.addr %s247, 4
        %s249 = scalar_lea.vmem %s1, %s248
        %s250 = sadd.s32 %s19, 1
        %s251 = smul.u32 %s250, 8
      $region32: #{tpu_custom_call.1} parent=23 // pred_fallthru
        _
      // Predicated region
      $region33: #{tpu_custom_call.1} parent=23 // pred_check
        %p252 = pneg %p111
      $region34: #{tpu_custom_call.1} parent=23 // pred_check_branch
        %254 = sbr.rel (%p252) target = $region36
      $region35: #{tpu_custom_call.1} parent=23 // pred_region
        %s255 = sadd.s32 %s19, 1
        %s256 = smul.u32 %s255, 8
        %s257 = sadd.s32 %s256, 1
        %p258 = scmp.lt.s32.totalorder %s18, 1
        %s259 = scalar_select %p258, %s18, 1
        %p260 = scmp.lt.s32.totalorder %s257, 17
        %s261 = scalar_select %p260, %s257, 17
        %s262 = smul.addr %s261, 3
        %s263 = smul.addr %s259, 54
        %s264 = sadd.s32 %s262, %s263
        %s265 = smul.addr %s264, 4
        %s266 = scalar_lea.vmem %s2, %s265
        %s267 = sadd.s32 %s19, 1
        %s268 = smul.u32 %s267, 8
        %s269 = sadd.s32 %s268, 1
      $region36: #{tpu_custom_call.1} parent=23 // pred_fallthru
        _
    $region24: #{tpu_custom_call.1} parent=5 // pred_fallthru
      _
    %p270 = scmp.le.s32.totalorder 1, %s11
    %p271 = scmp.lt.s32.totalorder %s11, 5
    %p272 = pnand %p270, %p271
    %p273 = pneg %p272
    // Predicated region
    $region37: #{tpu_custom_call.1} parent=5 // pred_check
      _
    $region38: #{tpu_custom_call.1} parent=5 // pred_check_branch
      %275 = sbr.rel (%p272) target = $region40
    $region39: #{tpu_custom_call.1} parent=5 // pred_region
      %s276 = ssub.s32 %s11, 1
      %s277 = smul.u32 8, %s21
      %s278 = ssub.s32 18, %s277
      %p279 = scmp.lt.s32.totalorder %s278, 8
      %s280 = scalar_select %p279, %s278, 8
      %s281 = smul.u32 4, %s280
      %s282 = smul.u32 %s281, 3
      %p283 = scmp.lt.s32.totalorder %s20, 1
      %s284 = scalar_select %p283, %s20, 1
      %p285 = scmp.lt.s32.totalorder %s277, 17
      %s286 = scalar_select %p285, %s277, 17
      %s287 = smul.addr %s286, 3
      %s288 = smul.addr %s284, 54
      %s289 = sadd.s32 %s287, %s288
      %s290 = smul.addr %s289, 4
      %s291 = scalar_lea.vmem %s0, %s290
      %p292 = pneg %p51
      %p293 = pneg %p48
      %s294 = sadd.s32 %s21, 1
      %s295 = smul.u32 %s294, 8
      %p296 = scmp.lt.s32.totalorder %s20, 1
      %s297 = scalar_select %p296, %s20, 1
      %p298 = scmp.lt.s32.totalorder %s295, 17
      %s299 = scalar_select %p298, %s295, 17
      %s300 = smul.addr %s299, 3
      %s301 = smul.addr %s297, 54
      %s302 = sadd.s32 %s300, %s301
      %s303 = smul.addr %s302, 4
      %s304 = scalar_lea.vmem %s1, %s303
      %p305 = pneg %p83
      %p306 = pneg %p80
      %s307 = sadd.s32 %s21, 1
      %s308 = smul.u32 %s307, 8
      %s309 = sadd.s32 %s308, 1
      %p310 = scmp.lt.s32.totalorder %s20, 1
      %s311 = scalar_select %p310, %s20, 1
      %p312 = scmp.lt.s32.totalorder %s309, 17
      %s313 = scalar_select %p312, %s309, 17
      %s314 = smul.addr %s313, 3
      %s315 = smul.addr %s311, 54
      %s316 = sadd.s32 %s314, %s315
      %s317 = smul.addr %s316, 4
      %s318 = scalar_lea.vmem %s2, %s317
      %p319 = pneg %p117
      %p320 = pneg %p114
      %p321 = pneg %p138
      %p322 = pneg %p135
      %p323 = pneg %p159
      %p324 = pneg %p156
      %p325 = pneg %p187
      %p326 = pneg %p184
      %s327 = smul.u32 8, %s21
      %p328 = scmp.lt.s32.totalorder %s20, 1
      %s329 = scalar_select %p328, %s20, 1
      %p330 = scmp.lt.s32.totalorder %s327, 15
      %s331 = scalar_select %p330, %s327, 15
      %s332 = smul.addr %s331, 4
      %s333 = smul.addr %s329, 64
      %s334 = sadd.s32 %s332, %s333
      %s335 = smul.addr %s334, 4
      %s336 = scalar_lea.vmem %s5, %s335
      %s337 = smul.u32 8, %s21
      %s338 = ssub.s32 18, %s337
      %p339 = scmp.lt.s32.totalorder %s338, 8
      %s340 = scalar_select %p339, %s338, 8
      %s341 = smul.u32 4, %s340
      %s342 = smul.u32 %s341, 3
      %p343 = scmp.lt.s32.totalorder %s20, 1
      %s344 = scalar_select %p343, %s20, 1
      %p345 = scmp.lt.s32.totalorder %s337, 17
      %s346 = scalar_select %p345, %s337, 17
      %s347 = smul.addr %s346, 3
      %s348 = smul.addr %s344, 54
      %s349 = sadd.s32 %s347, %s348
      %s350 = smul.addr %s349, 4
      %s351 = scalar_lea.vmem %s0, %s350
      %s352 = smul.u32 8, %s21
      %s353 = ssub.s32 18, %s352
      %p354 = scmp.lt.s32.totalorder %s353, 8
      %s355 = scalar_select %p354, %s353, 8
      %s356 = smul.u32 4, %s355
      %s357 = smul.u32 %s356, 3
      %s358 = sadd.s32 %s21, 1
      %s359 = smul.u32 %s358, 8
      %p360 = scmp.lt.s32.totalorder %s20, 1
      %s361 = scalar_select %p360, %s20, 1
      %p362 = scmp.lt.s32.totalorder %s359, 17
      %s363 = scalar_select %p362, %s359, 17
      %s364 = smul.addr %s363, 3
      %s365 = smul.addr %s361, 54
      %s366 = sadd.s32 %s364, %s365
      %s367 = smul.addr %s366, 4
      %s368 = scalar_lea.vmem %s1, %s367
      %s369 = sadd.s32 %s21, 1
      %s370 = smul.u32 %s369, 8
      %s371 = sadd.s32 %s21, 1
      %s372 = smul.u32 %s371, 8
      %s373 = sadd.s32 %s372, 1
      %p374 = scmp.lt.s32.totalorder %s20, 1
      %s375 = scalar_select %p374, %s20, 1
      %p376 = scmp.lt.s32.totalorder %s373, 17
      %s377 = scalar_select %p376, %s373, 17
      %s378 = smul.addr %s377, 3
      %s379 = smul.addr %s375, 54
      %s380 = sadd.s32 %s378, %s379
      %s381 = smul.addr %s380, 4
      %s382 = scalar_lea.vmem %s2, %s381
      %s383 = sadd.s32 %s21, 1
      %s384 = smul.u32 %s383, 8
      %s385 = sadd.s32 %s384, 1
      %s386 = smul.u32 8, %s21
      %p387 = scmp.lt.s32.totalorder %s20, 1
      %s388 = scalar_select %p387, %s20, 1
      %p389 = scmp.lt.s32.totalorder %s386, 15
      %s390 = scalar_select %p389, %s386, 15
      %s391 = smul.addr %s390, 4
      %s392 = smul.addr %s388, 64
      %s393 = sadd.s32 %s391, %s392
      %s394 = smul.addr %s393, 4
      %s395 = scalar_lea.vmem %s5, %s394
      %s396 = smul.u32 8, %s21
      %v398 = vld [vmem:[%s351] sm:$0xf]
      %v399 = vld [vmem:[%s351 + $0x4] sm:$0xf]
      %v400 = vld [vmem:[%s351 + $0x8] sm:$0x1]
      %v401 = vld [vmem:[%s351 + $0xc] sm:$0xf]
      %v402 = vld [vmem:[%s351 + $0x10] sm:$0xf]
      %v403 = vld [vmem:[%s351 + $0x14] sm:$0x1]
      %v404 = vld [vmem:[%s351 + $0x18] sm:$0xf]
      %v405 = vld [vmem:[%s351 + $0x1c] sm:$0xf]
      %v406 = vld [vmem:[%s351 + $0x20] sm:$0x1]
      %v407 = vld [vmem:[%s351 + $0x24] sm:$0xf]
      %v408 = vld [vmem:[%s351 + $0x28] sm:$0xf]
      %v409 = vld [vmem:[%s351 + $0x2c] sm:$0x1]
      %v410 = vld [vmem:[%s351 + $0x30] sm:$0xf]
      %v411 = vld [vmem:[%s351 + $0x34] sm:$0xf]
      %v412 = vld [vmem:[%s351 + $0x38] sm:$0x1]
      %v413 = vld [vmem:[%s351 + $0x3c] sm:$0xf]
      %v414 = vld [vmem:[%s351 + $0x40] sm:$0xf]
      %v415 = vld [vmem:[%s351 + $0x44] sm:$0x1]
      %v416 = vld [vmem:[%s351 + $0x48] sm:$0xf]
      %v417 = vld [vmem:[%s351 + $0x4c] sm:$0xf]
      %v418 = vld [vmem:[%s351 + $0x50] sm:$0x1]
      %v419 = vld [vmem:[%s351 + $0x54] sm:$0xf]
      %v420 = vld [vmem:[%s351 + $0x58] sm:$0xf]
      %v421 = vld [vmem:[%s351 + $0x5c] sm:$0x1]
      %v422 = vld [vmem:[%s368] sm:$0xf]
      %v423 = vld [vmem:[%s368 + $0x4] sm:$0xf]
      %v424 = vld [vmem:[%s368 + $0x8] sm:$0x1]
      %v425 = vld [vmem:[%s382] sm:$0xf]
      %v426 = vld [vmem:[%s382 + $0x4] sm:$0xf]
      %v427 = vld [vmem:[%s382 + $0x8] sm:$0x1]
      %v444 = vunpack.c.l.b16 %v398
      %v445 = vunpack.c.l.b16 %v399
      %v446 = vunpack.c.l.b16 %v401
      %v447 = vunpack.c.l.b16 %v402
      %v448 = vunpack.c.l.b16 %v404
      %v449 = vunpack.c.l.b16 %v405
      %v450 = vunpack.c.l.b16 %v407
      %v451 = vunpack.c.l.b16 %v408
      %v452 = vunpack.c.l.b16 %v410
      %v453 = vunpack.c.l.b16 %v411
      %v454 = vunpack.c.l.b16 %v413
      %v455 = vunpack.c.l.b16 %v414
      %v456 = vunpack.c.l.b16 %v416
      %v457 = vunpack.c.l.b16 %v417
      %v458 = vunpack.c.l.b16 %v419
      %v459 = vunpack.c.l.b16 %v420
      %v460 = vpack.c.b16 %v445, %v444
      %v461 = vpack.c.b16 %v447, %v446
      %v462 = vpack.c.b16 %v449, %v448
      %v463 = vpack.c.b16 %v451, %v450
      %v464 = vpack.c.b16 %v453, %v452
      %v465 = vpack.c.b16 %v455, %v454
      %v466 = vpack.c.b16 %v457, %v456
      %v467 = vpack.c.b16 %v459, %v458
      %v476 = vunpack.c.l.b16 %v400
      %v477 = vunpack.c.l.b16 %v403
      %v478 = vunpack.c.l.b16 %v406
      %v479 = vunpack.c.l.b16 %v409
      %v480 = vunpack.c.l.b16 %v412
      %v481 = vunpack.c.l.b16 %v415
      %v482 = vunpack.c.l.b16 %v418
      %v483 = vunpack.c.l.b16 %v421
      %v484 = vpack.c.b16 %v476, %v476
      %v485 = vpack.c.b16 %v477, %v477
      %v486 = vpack.c.b16 %v478, %v478
      %v487 = vpack.c.b16 %v479, %v479
      %v488 = vpack.c.b16 %v480, %v480
      %v489 = vpack.c.b16 %v481, %v481
      %v490 = vpack.c.b16 %v482, %v482
      %v491 = vpack.c.b16 %v483, %v483
      %vm492 = vsmask.f32 7424
      %v494 = vshrl.u32 %v460, 16
      %v496 = vshll.u32 %v460, 16
      %v498 = vrot.slane %v496, 1
      %v499 = vor.u32 %v494, %v498
      %v501 = vshll.u32 %v484, 16
      %v503 = vrot.slane %v501, 1
      %v504 = vsel %vm492, %v499, %v503
      %v506 = vshrl.u32 %v461, 16
      %v508 = vshll.u32 %v461, 16
      %v510 = vrot.slane %v508, 1
      %v511 = vor.u32 %v506, %v510
      %v513 = vshll.u32 %v485, 16
      %v515 = vrot.slane %v513, 1
      %v516 = vsel %vm492, %v511, %v515
      %v518 = vshrl.u32 %v462, 16
      %v520 = vshll.u32 %v462, 16
      %v522 = vrot.slane %v520, 1
      %v523 = vor.u32 %v518, %v522
      %v525 = vshll.u32 %v486, 16
      %v527 = vrot.slane %v525, 1
      %v528 = vsel %vm492, %v523, %v527
      %v530 = vshrl.u32 %v463, 16
      %v532 = vshll.u32 %v463, 16
      %v534 = vrot.slane %v532, 1
      %v535 = vor.u32 %v530, %v534
      %v537 = vshll.u32 %v487, 16
      %v539 = vrot.slane %v537, 1
      %v540 = vsel %vm492, %v535, %v539
      %v542 = vshrl.u32 %v464, 16
      %v544 = vshll.u32 %v464, 16
      %v546 = vrot.slane %v544, 1
      %v547 = vor.u32 %v542, %v546
      %v549 = vshll.u32 %v488, 16
      %v551 = vrot.slane %v549, 1
      %v552 = vsel %vm492, %v547, %v551
      %v554 = vshrl.u32 %v465, 16
      %v556 = vshll.u32 %v465, 16
      %v558 = vrot.slane %v556, 1
      %v559 = vor.u32 %v554, %v558
      %v561 = vshll.u32 %v489, 16
      %v563 = vrot.slane %v561, 1
      %v564 = vsel %vm492, %v559, %v563
      %v566 = vshrl.u32 %v466, 16
      %v568 = vshll.u32 %v466, 16
      %v570 = vrot.slane %v568, 1
      %v571 = vor.u32 %v566, %v570
      %v573 = vshll.u32 %v490, 16
      %v575 = vrot.slane %v573, 1
      %v576 = vsel %vm492, %v571, %v575
      %v578 = vshrl.u32 %v467, 16
      %v580 = vshll.u32 %v467, 16
      %v582 = vrot.slane %v580, 1
      %v583 = vor.u32 %v578, %v582
      %v585 = vshll.u32 %v491, 16
      %v587 = vrot.slane %v585, 1
      %v588 = vsel %vm492, %v583, %v587
      %589 = vrot.lane.b32.xlu0 %v504, 4
      %v590 = vpop.permute.xlu0 %589
      %591 = vrot.lane.b32.xlu0 %v516, 4
      %v592 = vpop.permute.xlu0 %591
      %593 = vrot.lane.b32.xlu0 %v528, 4
      %v594 = vpop.permute.xlu0 %593
      %595 = vrot.lane.b32.xlu0 %v540, 4
      %v596 = vpop.permute.xlu0 %595
      %597 = vrot.lane.b32.xlu0 %v552, 4
      %v598 = vpop.permute.xlu0 %597
      %599 = vrot.lane.b32.xlu0 %v564, 4
      %v600 = vpop.permute.xlu0 %599
      %601 = vrot.lane.b32.xlu0 %v576, 4
      %v602 = vpop.permute.xlu0 %601
      %603 = vrot.lane.b32.xlu0 %v588, 4
      %v604 = vpop.permute.xlu0 %603
      %vm605 = vcmask 1046528
      %v606 = vrot.slane %v460, 1
      %v607 = vrot.slane %v484, 1
      %v608 = vsel %vm605, %v606, %v607
      %v609 = vrot.slane %v461, 1
      %v610 = vrot.slane %v485, 1
      %v611 = vsel %vm605, %v609, %v610
      %v612 = vrot.slane %v462, 1
      %v613 = vrot.slane %v486, 1
      %v614 = vsel %vm605, %v612, %v613
      %v615 = vrot.slane %v463, 1
      %v616 = vrot.slane %v487, 1
      %v617 = vsel %vm605, %v615, %v616
      %v618 = vrot.slane %v464, 1
      %v619 = vrot.slane %v488, 1
      %v620 = vsel %vm605, %v618, %v619
      %v621 = vrot.slane %v465, 1
      %v622 = vrot.slane %v489, 1
      %v623 = vsel %vm605, %v621, %v622
      %v624 = vrot.slane %v466, 1
      %v625 = vrot.slane %v490, 1
      %v626 = vsel %vm605, %v624, %v625
      %v627 = vrot.slane %v467, 1
      %v628 = vrot.slane %v491, 1
      %v629 = vsel %vm605, %v627, %v628
      %630 = vrot.lane.b32.xlu0 %v608, 8
      %v631 = vpop.permute.xlu0 %630
      %632 = vrot.lane.b32.xlu0 %v611, 8
      %v633 = vpop.permute.xlu0 %632
      %634 = vrot.lane.b32.xlu0 %v614, 8
      %v635 = vpop.permute.xlu0 %634
      %636 = vrot.lane.b32.xlu0 %v617, 8
      %v637 = vpop.permute.xlu0 %636
      %638 = vrot.lane.b32.xlu0 %v620, 8
      %v639 = vpop.permute.xlu0 %638
      %640 = vrot.lane.b32.xlu0 %v623, 8
      %v641 = vpop.permute.xlu0 %640
      %642 = vrot.lane.b32.xlu0 %v626, 8
      %v643 = vpop.permute.xlu0 %642
      %644 = vrot.lane.b32.xlu0 %v629, 8
      %v645 = vpop.permute.xlu0 %644
      %v648 = vunpack.c.l.b16 %v422
      %v649 = vunpack.c.l.b16 %v423
      %v650 = vpack.c.b16 %v649, %v648
      %651 = vrot.lane.b32.xlu0 %v461, 12
      %v652 = vpop.permute.xlu0 %651
      %653 = vrot.lane.b32.xlu0 %v462, 12
      %v654 = vpop.permute.xlu0 %653
      %655 = vrot.lane.b32.xlu0 %v463, 12
      %v656 = vpop.permute.xlu0 %655
      %657 = vrot.lane.b32.xlu0 %v464, 12
      %v658 = vpop.permute.xlu0 %657
      %659 = vrot.lane.b32.xlu0 %v465, 12
      %v660 = vpop.permute.xlu0 %659
      %661 = vrot.lane.b32.xlu0 %v466, 12
      %v662 = vpop.permute.xlu0 %661
      %663 = vrot.lane.b32.xlu0 %v467, 12
      %v664 = vpop.permute.xlu0 %663
      %665 = vrot.lane.b32.xlu0 %v650, 12
      %v666 = vpop.permute.xlu0 %665
      %v668 = vunpack.c.l.b16 %v424
      %v669 = vpack.c.b16 %v668, %v668
      %v671 = vshrl.u32 %v650, 16
      %v673 = vshll.u32 %v650, 16
      %v675 = vrot.slane %v673, 1
      %v676 = vor.u32 %v671, %v675
      %v678 = vshll.u32 %v669, 16
      %v680 = vrot.slane %v678, 1
      %v681 = vsel %vm492, %v676, %v680
      %682 = vrot.lane.b32.xlu0 %v516, 16
      %v683 = vpop.permute.xlu0 %682
      %684 = vrot.lane.b32.xlu0 %v528, 16
      %v685 = vpop.permute.xlu0 %684
      %686 = vrot.lane.b32.xlu0 %v540, 16
      %v687 = vpop.permute.xlu0 %686
      %688 = vrot.lane.b32.xlu0 %v552, 16
      %v689 = vpop.permute.xlu0 %688
      %690 = vrot.lane.b32.xlu0 %v564, 16
      %v691 = vpop.permute.xlu0 %690
      %692 = vrot.lane.b32.xlu0 %v576, 16
      %v693 = vpop.permute.xlu0 %692
      %694 = vrot.lane.b32.xlu0 %v588, 16
      %v695 = vpop.permute.xlu0 %694
      %696 = vrot.lane.b32.xlu0 %v681, 16
      %v697 = vpop.permute.xlu0 %696
      %v698 = vrot.slane %v650, 1
      %v699 = vrot.slane %v669, 1
      %v700 = vsel %vm605, %v698, %v699
      %701 = vrot.lane.b32.xlu0 %v611, 20
      %v702 = vpop.permute.xlu0 %701
      %703 = vrot.lane.b32.xlu0 %v614, 20
      %v704 = vpop.permute.xlu0 %703
      %705 = vrot.lane.b32.xlu0 %v617, 20
      %v706 = vpop.permute.xlu0 %705
      %707 = vrot.lane.b32.xlu0 %v620, 20
      %v708 = vpop.permute.xlu0 %707
      %709 = vrot.lane.b32.xlu0 %v623, 20
      %v710 = vpop.permute.xlu0 %709
      %711 = vrot.lane.b32.xlu0 %v626, 20
      %v712 = vpop.permute.xlu0 %711
      %713 = vrot.lane.b32.xlu0 %v629, 20
      %v714 = vpop.permute.xlu0 %713
      %715 = vrot.lane.b32.xlu0 %v700, 20
      %v716 = vpop.permute.xlu0 %715
      %v719 = vunpack.c.l.b16 %v425
      %v720 = vunpack.c.l.b16 %v426
      %v721 = vpack.c.b16 %v720, %v719
      %722 = vrot.lane.b32.xlu0 %v462, 24
      %v723 = vpop.permute.xlu0 %722
      %724 = vrot.lane.b32.xlu0 %v463, 24
      %v725 = vpop.permute.xlu0 %724
      %726 = vrot.lane.b32.xlu0 %v464, 24
      %v727 = vpop.permute.xlu0 %726
      %728 = vrot.lane.b32.xlu0 %v465, 24
      %v729 = vpop.permute.xlu0 %728
      %730 = vrot.lane.b32.xlu0 %v466, 24
      %v731 = vpop.permute.xlu0 %730
      %732 = vrot.lane.b32.xlu0 %v467, 24
      %v733 = vpop.permute.xlu0 %732
      %734 = vrot.lane.b32.xlu0 %v650, 24
      %v735 = vpop.permute.xlu0 %734
      %736 = vrot.lane.b32.xlu0 %v721, 24
      %v737 = vpop.permute.xlu0 %736
      %v739 = vunpack.c.l.b16 %v427
      %v740 = vpack.c.b16 %v739, %v739
      %v742 = vshrl.u32 %v721, 16
      %v744 = vshll.u32 %v721, 16
      %v746 = vrot.slane %v744, 1
      %v747 = vor.u32 %v742, %v746
      %v749 = vshll.u32 %v740, 16
      %v751 = vrot.slane %v749, 1
      %v752 = vsel %vm492, %v747, %v751
      %753 = vrot.lane.b32.xlu0 %v528, 28
      %v754 = vpop.permute.xlu0 %753
      %755 = vrot.lane.b32.xlu0 %v540, 28
      %v756 = vpop.permute.xlu0 %755
      %757 = vrot.lane.b32.xlu0 %v552, 28
      %v758 = vpop.permute.xlu0 %757
      %759 = vrot.lane.b32.xlu0 %v564, 28
      %v760 = vpop.permute.xlu0 %759
      %761 = vrot.lane.b32.xlu0 %v576, 28
      %v762 = vpop.permute.xlu0 %761
      %763 = vrot.lane.b32.xlu0 %v588, 28
      %v764 = vpop.permute.xlu0 %763
      %765 = vrot.lane.b32.xlu0 %v681, 28
      %v766 = vpop.permute.xlu0 %765
      %767 = vrot.lane.b32.xlu0 %v752, 28
      %v768 = vpop.permute.xlu0 %767
      %v769 = vrot.slane %v721, 1
      %v770 = vrot.slane %v740, 1
      %v771 = vsel %vm605, %v769, %v770
      %772 = vrot.lane.b32.xlu0 %v614, 32
      %v773 = vpop.permute.xlu0 %772
      %774 = vrot.lane.b32.xlu0 %v617, 32
      %v775 = vpop.permute.xlu0 %774
      %776 = vrot.lane.b32.xlu0 %v620, 32
      %v777 = vpop.permute.xlu0 %776
      %778 = vrot.lane.b32.xlu0 %v623, 32
      %v779 = vpop.permute.xlu0 %778
      %780 = vrot.lane.b32.xlu0 %v626, 32
      %v781 = vpop.permute.xlu0 %780
      %782 = vrot.lane.b32.xlu0 %v629, 32
      %v783 = vpop.permute.xlu0 %782
      %784 = vrot.lane.b32.xlu0 %v700, 32
      %v785 = vpop.permute.xlu0 %784
      %786 = vrot.lane.b32.xlu0 %v771, 32
      %v787 = vpop.permute.xlu0 %786
      %vm788 = vcmask 31744
      %v790 = vsel %vm788, %v460, %v590
      %v792 = vsel %vm788, %v461, %v592
      %v794 = vsel %vm788, %v462, %v594
      %v796 = vsel %vm788, %v463, %v596
      %v798 = vsel %vm788, %v464, %v598
      %v800 = vsel %vm788, %v465, %v600
      %v802 = vsel %vm788, %v466, %v602
      %v804 = vsel %vm788, %v467, %v604
      %vm805 = vcmask 64512
      %v807 = vsel %vm805, %v790, %v631
      %v809 = vsel %vm805, %v792, %v633
      %v811 = vsel %vm805, %v794, %v635
      %v813 = vsel %vm805, %v796, %v637
      %v815 = vsel %vm805, %v798, %v639
      %v817 = vsel %vm805, %v800, %v641
      %v819 = vsel %vm805, %v802, %v643
      %v821 = vsel %vm805, %v804, %v645
      %vm822 = vcmask 97280
      %v824 = vsel %vm822, %v807, %v652
      %v826 = vsel %vm822, %v809, %v654
      %v828 = vsel %vm822, %v811, %v656
      %v830 = vsel %vm822, %v813, %v658
      %v832 = vsel %vm822, %v815, %v660
      %v834 = vsel %vm822, %v817, %v662
      %v836 = vsel %vm822, %v819, %v664
      %v838 = vsel %vm822, %v821, %v666
      %vm839 = vcmask 130048
      %v841 = vsel %vm839, %v824, %v683
      %v843 = vsel %vm839, %v826, %v685
      %v845 = vsel %vm839, %v828, %v687
      %v847 = vsel %vm839, %v830, %v689
      %v849 = vsel %vm839, %v832, %v691
      %v851 = vsel %vm839, %v834, %v693
      %v853 = vsel %vm839, %v836, %v695
      %v855 = vsel %vm839, %v838, %v697
      %vm856 = vcmask 162816
      %v858 = vsel %vm856, %v841, %v702
      %v860 = vsel %vm856, %v843, %v704
      %v862 = vsel %vm856, %v845, %v706
      %v864 = vsel %vm856, %v847, %v708
      %v866 = vsel %vm856, %v849, %v710
      %v868 = vsel %vm856, %v851, %v712
      %v870 = vsel %vm856, %v853, %v714
      %v872 = vsel %vm856, %v855, %v716
      %vm873 = vcmask 195584
      %v875 = vsel %vm873, %v858, %v723
      %v877 = vsel %vm873, %v860, %v725
      %v879 = vsel %vm873, %v862, %v727
      %v881 = vsel %vm873, %v864, %v729
      %v883 = vsel %vm873, %v866, %v731
      %v885 = vsel %vm873, %v868, %v733
      %v887 = vsel %vm873, %v870, %v735
      %v889 = vsel %vm873, %v872, %v737
      %vm890 = vcmask 228352
      %v892 = vsel %vm890, %v875, %v754
      %v894 = vsel %vm890, %v877, %v756
      %v896 = vsel %vm890, %v879, %v758
      %v898 = vsel %vm890, %v881, %v760
      %v900 = vsel %vm890, %v883, %v762
      %v902 = vsel %vm890, %v885, %v764
      %v904 = vsel %vm890, %v887, %v766
      %v906 = vsel %vm890, %v889, %v768
      %vm907 = vcmask 261120
      %v909 = vsel %vm907, %v892, %v773
      %v911 = vsel %vm907, %v894, %v775
      %v913 = vsel %vm907, %v896, %v777
      %v915 = vsel %vm907, %v898, %v779
      %v917 = vsel %vm907, %v900, %v781
      %v919 = vsel %vm907, %v902, %v783
      %v921 = vsel %vm907, %v904, %v785
      %v923 = vsel %vm907, %v906, %v787
      %v924 = vld [vmem:[%s3] sm:$0xf]
      %v925 = vld [vmem:[%s3 + $0x4] sm:$0xf]
      %v926 = vld [vmem:[%s3 + $0x8] sm:$0xf]
      %v927 = vld [vmem:[%s3 + $0xc] sm:$0xf]
      %v928 = vld [vmem:[%s3 + $0x10] sm:$0x3]
      %v929 = vld [vmem:[%s4] sm:$0x1]
      %v931 = vperm.slane %v929, 0
      %v938 = vunpack.c.l.b16 %v924
      %v939 = vunpack.c.l.b16 %v925
      %v940 = vunpack.c.l.b16 %v926
      %v941 = vunpack.c.l.b16 %v927
      %v942 = vunpack.c.l.b16 %v928
      %v943 = vpack.c.b16 %v939, %v938
      %v944 = vpack.c.b16 %v941, %v940
      %v945 = vpack.c.b16 %v942, %v942
      %vm948 = vcmask 293888
      %v949 = vsel %vm948, %v909, 0
      %v951 = vsel %vm948, %v911, 0
      %v953 = vsel %vm948, %v913, 0
      %v955 = vsel %vm948, %v915, 0
      %v957 = vsel %vm948, %v917, 0
      %v959 = vsel %vm948, %v919, 0
      %v961 = vsel %vm948, %v921, 0
      %v963 = vsel %vm948, %v923, 0
      %vm965 = vcmask 1041408
      %v967 = vsel %vm965, %v945, 0
      %969 = vmatpush.bf16.msra.mxu0 0
      %970 = vmatpush.bf16.msra.mxu0 0
      %971 = vmatpush.bf16.msra.mxu0 0
      %972 = vmatpush.bf16.msra.mxu0 0
      %973 = vmatpush.bf16.msra.mxu0 0
      %974 = vmatpush.bf16.msra.mxu0 %v967
      %975 = vmatpush.bf16.msra.mxu0 %v944
      %976 = vmatpush.bf16.msra.mxu0 %v943
      %977 = vmatmul.bf16.gmra.mxu0 %v949
      %v978 = vpop.f32.mrf.mxu0
      %v979 = vadd.f32 %v931, %v978
      %v980 = vpop.f32.mrf.mxu0
      %v981 = vadd.f32 %v931, %v980
      %982 = vmatmul.bf16.gmra.mxu0 %v951
      %v983 = vpop.f32.mrf.mxu0
      %v984 = vadd.f32 %v931, %v983
      %v985 = vpop.f32.mrf.mxu0
      %v986 = vadd.f32 %v931, %v985
      %987 = vmatmul.bf16.gmra.mxu0 %v953
      %v988 = vpop.f32.mrf.mxu0
      %v989 = vadd.f32 %v931, %v988
      %v990 = vpop.f32.mrf.mxu0
      %v991 = vadd.f32 %v931, %v990
      %992 = vmatmul.bf16.gmra.mxu0 %v955
      %v993 = vpop.f32.mrf.mxu0
      %v994 = vadd.f32 %v931, %v993
      %v995 = vpop.f32.mrf.mxu0
      %v996 = vadd.f32 %v931, %v995
      %997 = vmatmul.bf16.gmra.mxu0 %v957
      %v998 = vpop.f32.mrf.mxu0
      %v999 = vadd.f32 %v931, %v998
      %v1000 = vpop.f32.mrf.mxu0
      %v1001 = vadd.f32 %v931, %v1000
      %1002 = vmatmul.bf16.gmra.mxu0 %v959
      %v1003 = vpop.f32.mrf.mxu0
      %v1004 = vadd.f32 %v931, %v1003
      %v1005 = vpop.f32.mrf.mxu0
      %v1006 = vadd.f32 %v931, %v1005
      %1007 = vmatmul.bf16.gmra.mxu0 %v961
      %v1008 = vpop.f32.mrf.mxu0
      %v1009 = vadd.f32 %v931, %v1008
      %v1010 = vpop.f32.mrf.mxu0
      %v1011 = vadd.f32 %v931, %v1010
      %1012 = vmatmul.bf16.gmra.mxu0 %v963
      %v1013 = vpop.f32.mrf.mxu0
      %v1014 = vadd.f32 %v931, %v1013
      %v1015 = vpop.f32.mrf.mxu0
      %v1016 = vadd.f32 %v931, %v1015
      %1017 = vdwg.mxu0
      %v1018 = vmax.f32 %v979, 0.0
      %v1019 = vmax.f32 %v981, 0.0
      %v1020 = vmax.f32 %v984, 0.0
      %v1021 = vmax.f32 %v986, 0.0
      %v1022 = vmax.f32 %v989, 0.0
      %v1023 = vmax.f32 %v991, 0.0
      %v1024 = vmax.f32 %v994, 0.0
      %v1025 = vmax.f32 %v996, 0.0
      %v1026 = vmax.f32 %v999, 0.0
      %v1027 = vmax.f32 %v1001, 0.0
      %v1028 = vmax.f32 %v1004, 0.0
      %v1029 = vmax.f32 %v1006, 0.0
      %v1030 = vmax.f32 %v1009, 0.0
      %v1031 = vmax.f32 %v1011, 0.0
      %v1032 = vmax.f32 %v1014, 0.0
      %v1033 = vmax.f32 %v1016, 0.0
      %v1034 = vpack.c.bf16 %v1018, %v1018
      %v1035 = vpack.c.bf16 %v1019, %v1019
      %v1036 = vpack.c.bf16 %v1020, %v1020
      %v1037 = vpack.c.bf16 %v1021, %v1021
      %v1038 = vpack.c.bf16 %v1022, %v1022
      %v1039 = vpack.c.bf16 %v1023, %v1023
      %v1040 = vpack.c.bf16 %v1024, %v1024
      %v1041 = vpack.c.bf16 %v1025, %v1025
      %v1042 = vpack.c.bf16 %v1026, %v1026
      %v1043 = vpack.c.bf16 %v1027, %v1027
      %v1044 = vpack.c.bf16 %v1028, %v1028
      %v1045 = vpack.c.bf16 %v1029, %v1029
      %v1046 = vpack.c.bf16 %v1030, %v1030
      %v1047 = vpack.c.bf16 %v1031, %v1031
      %v1048 = vpack.c.bf16 %v1032, %v1032
      %v1049 = vpack.c.bf16 %v1033, %v1033
      %vm1050 = vcmask 60416
      %1051 = vst.msk [vmem:[%s395] sm:$0xf] %vm1050, %v1034
      %1052 = vst.msk [vmem:[%s395 + $0x4] sm:$0xf] %vm1050, %v1035
      %1053 = vst.msk [vmem:[%s395 + $0x10] sm:$0xf] %vm1050, %v1036
      %1054 = vst.msk [vmem:[%s395 + $0x14] sm:$0xf] %vm1050, %v1037
      %1055 = vst.msk [vmem:[%s395 + $0x20] sm:$0xf] %vm1050, %v1038
      %1056 = vst.msk [vmem:[%s395 + $0x24] sm:$0xf] %vm1050, %v1039
      %1057 = vst.msk [vmem:[%s395 + $0x30] sm:$0xf] %vm1050, %v1040
      %1058 = vst.msk [vmem:[%s395 + $0x34] sm:$0xf] %vm1050, %v1041
      %1059 = vst.msk [vmem:[%s395 + $0x40] sm:$0xf] %vm1050, %v1042
      %1060 = vst.msk [vmem:[%s395 + $0x44] sm:$0xf] %vm1050, %v1043
      %1061 = vst.msk [vmem:[%s395 + $0x50] sm:$0xf] %vm1050, %v1044
      %1062 = vst.msk [vmem:[%s395 + $0x54] sm:$0xf] %vm1050, %v1045
      %1063 = vst.msk [vmem:[%s395 + $0x60] sm:$0xf] %vm1050, %v1046
      %1064 = vst.msk [vmem:[%s395 + $0x64] sm:$0xf] %vm1050, %v1047
      %1065 = vst.msk [vmem:[%s395 + $0x70] sm:$0xf] %vm1050, %v1048
      %1066 = vst.msk [vmem:[%s395 + $0x74] sm:$0xf] %vm1050, %v1049
      %1083 = vrot.lane.b32.xlu0 %v1034, 120
      %v1084 = vpop.permute.xlu0 %1083
      %1085 = vrot.lane.b32.xlu0 %v1035, 120
      %v1086 = vpop.permute.xlu0 %1085
      %1087 = vrot.lane.b32.xlu0 %v1036, 120
      %v1088 = vpop.permute.xlu0 %1087
      %1089 = vrot.lane.b32.xlu0 %v1037, 120
      %v1090 = vpop.permute.xlu0 %1089
      %1091 = vrot.lane.b32.xlu0 %v1038, 120
      %v1092 = vpop.permute.xlu0 %1091
      %1093 = vrot.lane.b32.xlu0 %v1039, 120
      %v1094 = vpop.permute.xlu0 %1093
      %1095 = vrot.lane.b32.xlu0 %v1040, 120
      %v1096 = vpop.permute.xlu0 %1095
      %1097 = vrot.lane.b32.xlu0 %v1041, 120
      %v1098 = vpop.permute.xlu0 %1097
      %1099 = vrot.lane.b32.xlu0 %v1042, 120
      %v1100 = vpop.permute.xlu0 %1099
      %1101 = vrot.lane.b32.xlu0 %v1043, 120
      %v1102 = vpop.permute.xlu0 %1101
      %1103 = vrot.lane.b32.xlu0 %v1044, 120
      %v1104 = vpop.permute.xlu0 %1103
      %1105 = vrot.lane.b32.xlu0 %v1045, 120
      %v1106 = vpop.permute.xlu0 %1105
      %1107 = vrot.lane.b32.xlu0 %v1046, 120
      %v1108 = vpop.permute.xlu0 %1107
      %1109 = vrot.lane.b32.xlu0 %v1047, 120
      %v1110 = vpop.permute.xlu0 %1109
      %1111 = vrot.lane.b32.xlu0 %v1048, 120
      %v1112 = vpop.permute.xlu0 %1111
      %1113 = vrot.lane.b32.xlu0 %v1049, 120
      %v1114 = vpop.permute.xlu0 %1113
      %s1131 = scalar_lea.vmem %s395, 8
      %1132 = vst.msk [vmem:[%s1131] sm:$0xf] %vm1050, %v1084
      %1133 = vst.msk [vmem:[%s1131 + $0x4] sm:$0xf] %vm1050, %v1086
      %1134 = vst.msk [vmem:[%s1131 + $0x10] sm:$0xf] %vm1050, %v1088
      %1135 = vst.msk [vmem:[%s1131 + $0x14] sm:$0xf] %vm1050, %v1090
      %1136 = vst.msk [vmem:[%s1131 + $0x20] sm:$0xf] %vm1050, %v1092
      %1137 = vst.msk [vmem:[%s1131 + $0x24] sm:$0xf] %vm1050, %v1094
      %1138 = vst.msk [vmem:[%s1131 + $0x30] sm:$0xf] %vm1050, %v1096
      %1139 = vst.msk [vmem:[%s1131 + $0x34] sm:$0xf] %vm1050, %v1098
      %1140 = vst.msk [vmem:[%s1131 + $0x40] sm:$0xf] %vm1050, %v1100
      %1141 = vst.msk [vmem:[%s1131 + $0x44] sm:$0xf] %vm1050, %v1102
      %1142 = vst.msk [vmem:[%s1131 + $0x50] sm:$0xf] %vm1050, %v1104
      %1143 = vst.msk [vmem:[%s1131 + $0x54] sm:$0xf] %vm1050, %v1106
      %1144 = vst.msk [vmem:[%s1131 + $0x60] sm:$0xf] %vm1050, %v1108
      %1145 = vst.msk [vmem:[%s1131 + $0x64] sm:$0xf] %vm1050, %v1110
      %1146 = vst.msk [vmem:[%s1131 + $0x70] sm:$0xf] %vm1050, %v1112
      %1147 = vst.msk [vmem:[%s1131 + $0x74] sm:$0xf] %vm1050, %v1114
      %s1148 = smul.u32 8, %s21
      %p1149 = scmp.lt.s32.totalorder %s20, 1
      %s1150 = scalar_select %p1149, %s20, 1
      %p1151 = scmp.lt.s32.totalorder %s1148, 15
      %s1152 = scalar_select %p1151, %s1148, 15
      %s1153 = smul.addr %s1152, 4
      %s1154 = smul.addr %s1150, 64
      %s1155 = sadd.s32 %s1153, %s1154
      %s1156 = smul.addr %s1155, 4
      %s1157 = scalar_lea.vmem %s5, %s1156
      // Predicated region
      $region41: #{tpu_custom_call.1} parent=39 // pred_check
        %p1158 = pneg %p184
      $region42: #{tpu_custom_call.1} parent=39 // pred_check_branch
        %1160 = sbr.rel (%p1158) target = $region44
      $region43: #{tpu_custom_call.1} parent=39 // pred_region
        %s1161 = smul.u32 8, %s21
      $region44: #{tpu_custom_call.1} parent=39 // pred_fallthru
        _
    $region40: #{tpu_custom_call.1} parent=5 // pred_fallthru
      _
    %p1162 = scmp.le.s32.totalorder 2, %s11
    // Predicated region
    $region45: #{tpu_custom_call.1} parent=5 // pred_check
      %p1163 = pneg %p1162
    $region46: #{tpu_custom_call.1} parent=5 // pred_check_branch
      %1165 = sbr.rel (%p1163) target = $region48
    $region47: #{tpu_custom_call.1} parent=5 // pred_region
      %s1166 = ssub.s32 %s11, 2
      // Predicated region
      $region49: #{tpu_custom_call.1} parent=47 // pred_check
        %p1167 = pneg %p190
      $region50: #{tpu_custom_call.1} parent=47 // pred_check_branch
        %1169 = sbr.rel (%p1167) target = $region52
      $region51: #{tpu_custom_call.1} parent=47 // pred_region
        %s1170 = smul.u32 8, %s23
        %p1171 = scmp.lt.s32.totalorder %s22, 1
        %s1172 = scalar_select %p1171, %s22, 1
        %p1173 = scmp.lt.s32.totalorder %s1170, 15
        %s1174 = scalar_select %p1173, %s1170, 15
        %s1175 = smul.addr %s1174, 4
        %s1176 = smul.addr %s1172, 64
        %s1177 = sadd.s32 %s1175, %s1176
        %s1178 = smul.addr %s1177, 4
        %s1179 = scalar_lea.vmem %s5, %s1178
      $region52: #{tpu_custom_call.1} parent=47 // pred_fallthru
        _
    $region48: #{tpu_custom_call.1} parent=5 // pred_fallthru
      _
  $region6: #{tpu_custom_call.1} parent=0 // loop_footer
    %s15 = sadd.s32 1, %s11
  $region7: #{tpu_custom_call.1} parent=0 // loop_footer_branch
    %10 = sbr.rel target = $region3
  $region8: #{tpu_custom_call.1} parent=0 // loop_exit
    _

</llo_original>
